<compile_context>
chip_gen: v6e
topology: v6e:2x2x1
jax: 0.10.0
libtpu: 0.0.40
codegen_flags: <defaults>
</compile_context>

<pallas_src>
import jax
import jax.numpy as jnp
from jax.experimental import pallas as pl
from jax.experimental.pallas import tpu as pltpu

LANES = 128
_NEG_PAD = -1e4  # padded/masked logit: exp(-|x|) underflows to exactly 0


def _make_kernel(rows_tile, acc_rows, ragged, valid_last):
    """Grid = (n_splits, B, tiles_per_split); blocks x/y: (1, rows_tile, 128)."""

    def kernel(x_ref, y_ref, out_ref, acc_bce, acc_int, acc_p, acc_t):
        j = pl.program_id(2)
        nj = pl.num_programs(2)

        @pl.when(j == 0)
        def _():
            acc_bce[...] = jnp.zeros_like(acc_bce)
            acc_int[...] = jnp.zeros_like(acc_int)
            acc_p[...] = jnp.zeros_like(acc_p)
            acc_t[...] = jnp.zeros_like(acc_t)

        x = x_ref[0].astype(jnp.float32)          # (rows_tile, 128)
        y = y_ref[0].astype(jnp.float32)

        def fold(v):
            # (rows_tile, 128) -> (acc_rows, 128) sublane partial sums (in vregs).
            if acc_rows == rows_tile:
                return v
            if acc_rows == 1:
                return jnp.sum(v, axis=0, keepdims=True)
            return jnp.sum(v.reshape(rows_tile // acc_rows, acc_rows, LANES),
                           axis=0)

        def accumulate(xv, yv):
            e = jnp.exp(-jnp.abs(xv))             # exp(-|x|), shared
            sp = jnp.log1p(e)                     # log(1 + exp(-|x|))
            # PyTorch-stable BCE with logits: max(x,0) - x*y + log1p(exp(-|x|))
            bce = jnp.maximum(xv, 0.0) - xv * yv + sp
            t = jnp.exp(-sp)                      # = 1 / (1 + exp(-|x|))   (EUP)
            p = jnp.where(xv >= 0.0, t, 1.0 - t)  # sigmoid(x)
            acc_bce[...] += fold(bce)
            acc_int[...] += fold(p * yv)
            acc_p[...] += fold(p)
            acc_t[...] += fold(yv)

        if ragged:
            # Only the globally-last tile over-runs the row extent; its
            # out-of-bounds rows hold unspecified data and must be masked.
            is_last_global = jnp.logical_and(
                pl.program_id(0) == pl.num_programs(0) - 1, j == nj - 1)

            @pl.when(jnp.logical_not(is_last_global))
            def _():
                accumulate(x, y)

            @pl.when(is_last_global)
            def _():
                rid = jax.lax.broadcasted_iota(jnp.int32, (rows_tile, LANES), 0)
                keep = rid < valid_last
                accumulate(jnp.where(keep, x, _NEG_PAD),
                           jnp.where(keep, y, 0.0))
        else:
            accumulate(x, y)

        @pl.when(j == nj - 1)
        def _():
            out_ref[0, 0, 0, :] = jnp.sum(acc_bce[...], axis=0)
            out_ref[0, 0, 1, :] = jnp.sum(acc_int[...], axis=0)
            out_ref[0, 0, 2, :] = jnp.sum(acc_p[...], axis=0)
            out_ref[0, 0, 3, :] = jnp.sum(acc_t[...], axis=0)

    return kernel


def total_loss(logits_nchw, target_nchw, *, max_rows_tile=1024):
    """Reproduces TotalLoss.forward: BCE(mean) + (1 - mean dice) + csd(=0)."""
    B = logits_nchw.shape[0]
    D = int(logits_nchw.size) // B

    x = logits_nchw.reshape(B, D)                 # original dtype, no f32 copy
    y = target_nchw.reshape(B, D)

    itemsize = jnp.dtype(x.dtype).itemsize
    sub = 8 * max(1, 4 // itemsize)               # 8/f32, 16/bf16, 32/int8

    rows = -(-D // LANES)                         # ceil(D / 128)
    if rows * LANES != D:
        # Fallback copy (only when D is not lane-aligned): pad the sub-128
        # remainder (+ a sublane-group round-up, since we copy anyway) with a
        # large-negative logit / zero target so padded elems contribute ~0.
        rows = -(-rows // sub) * sub
        pad = rows * LANES - D
        x = jnp.concatenate(
            [x, jnp.full((B, pad), _NEG_PAD, dtype=x.dtype)], axis=1)
        y = jnp.concatenate(
            [y, jnp.zeros((B, pad), dtype=y.dtype)], axis=1)
    x3 = x.reshape(B, rows, LANES)                # free view when D % 128 == 0
    y3 = y.reshape(B, rows, LANES)

    # ---- row tiling (dtype-aware sublane rounding) ----
    rows_tile = min(max_rows_tile, rows)
    if rows_tile < rows:
        rows_tile = min(-(-rows_tile // sub) * sub, rows)
    n_tiles = -(-rows // rows_tile)
    valid_last = rows - (n_tiles - 1) * rows_tile
    ragged = valid_last != rows_tile

    # v7x megacore: if B alone can't fill both TensorCores (odd B), split each
    # sample's row range across a second "parallel" axis. No-op on v5e/v6e.
    n_splits = 2 if (B % 2 == 1 and n_tiles >= 2 and n_tiles % 2 == 0) else 1
    tps = n_tiles // n_splits

    acc_rows = 8 if rows_tile % 8 == 0 else 1

    kernel = _make_kernel(rows_tile, acc_rows, ragged, valid_last)

    in_spec = pl.BlockSpec((1, rows_tile, LANES),
                           lambda s, b, j: (b, s * tps + j, 0))
    out_spec = pl.BlockSpec((1, 1, 4, LANES), lambda s, b, j: (s, b, 0, 0))
    out_shape = jax.ShapeDtypeStruct((n_splits, B, 4, LANES), jnp.float32)

    block_bytes = rows_tile * LANES * itemsize
    tile_f32 = rows_tile * LANES * 4
    vmem_need = (2 * 2 * block_bytes              # double-buffered x / y tiles
                 + 8 * tile_f32                   # headroom for fused f32 temps
                 + 4 * acc_rows * LANES * 4       # accumulators
                 + 2 * 4 * LANES * 4)             # output block
    vmem_limit = int(min(64 * 1024 * 1024, max(16 * 1024 * 1024, 2 * vmem_need)))

    n_elem = B * rows * LANES
    cost = pl.CostEstimate(
        flops=int(12 * n_elem),
        transcendentals=int(3 * n_elem),
        bytes_accessed=int(2 * n_elem * itemsize + n_splits * B * 4 * LANES * 4),
    )

    parts = pl.pallas_call(
        kernel,
        out_shape=out_shape,
        grid_spec=pltpu.PrefetchScalarGridSpec(
            num_scalar_prefetch=0,
            grid=(n_splits, B, tps),
            in_specs=[in_spec, in_spec],
            out_specs=out_spec,
            scratch_shapes=[pltpu.VMEM((acc_rows, LANES), jnp.float32)
                            for _ in range(4)],
        ),
        compiler_params=pltpu.CompilerParams(
            dimension_semantics=("parallel", "parallel", "arbitrary"),
            vmem_limit_bytes=vmem_limit,
        ),
        cost_estimate=cost,
    )(x3, y3)

    # ---- tiny JAX epilogue: one reduce over (splits, lanes), then scalars ----
    sums = jnp.sum(parts, axis=(0, 3))            # (B, 4): bce, inter, psum, tsum
    bce = jnp.sum(sums[:, 0]) / (B * D)           # mean over the real B*D elems
    smooth = 1e-05
    dice = (2.0 * sums[:, 1] + smooth) / (sums[:, 2] + sums[:, 3] + smooth)
    dice_loss = 1.0 - jnp.sum(dice) / B
    csd_loss = jnp.float32(0.0)                   # analytically zero (see header)
    return bce + dice_loss + csd_loss


def _reference(logits, target):
    """Pure-JAX reference of the same math, for a sanity check."""
    B = logits.shape[0]
    x = logits.reshape(B, -1).astype(jnp.float32)
    y = target.reshape(B, -1).astype(jnp.float32)
    bce = jnp.mean(jnp.maximum(x, 0.0) - x * y + jnp.log1p(jnp.exp(-jnp.abs(x))))
    p = jax.nn.sigmoid(x)
    smooth = 1e-05
    dice = (2.0 * jnp.sum(p * y, 1) + smooth) / (jnp.sum(p, 1) + jnp.sum(y, 1) + smooth)
    return bce + (1.0 - jnp.mean(dice)) + 0.0


if __name__ == "__main__":
    key = jax.random.PRNGKey(0)

    # Primary case (shapes implied by the PyTorch module).
    k1, k2 = jax.random.split(key)
    B, C, H, W = 2, 4, 16, 16
    logits = jax.random.normal(k1, (B, C, H, W), dtype=jnp.float32)
    target = (jax.random.uniform(k2, (B, C, H, W)) > 0.5).astype(jnp.float32)
    out = jax.block_until_ready(total_loss(logits, target))
    ref = _reference(logits, target)
    assert jnp.allclose(out, ref, atol=1e-5, rtol=1e-4), (out, ref)

    # Ragged last tile + odd-B row-split (v7x megacore) path.
    k3, k4 = jax.random.split(k1)
    lg2 = jax.random.normal(k3, (1, 3, 32, 32), dtype=jnp.float32)
    tg2 = (jax.random.uniform(k4, (1, 3, 32, 32)) > 0.5).astype(jnp.float32)
    out2 = jax.block_until_ready(total_loss(lg2, tg2, max_rows_tile=10))
    ref2 = _reference(lg2, tg2)
    assert jnp.allclose(out2, ref2, atol=1e-5, rtol=1e-4), (out2, ref2)

    # D % 128 != 0 fallback (small remainder pad) path.
    k5, k6 = jax.random.split(k2)
    lg3 = jax.random.normal(k5, (2, 3, 10, 10), dtype=jnp.float32)
    tg3 = (jax.random.uniform(k6, (2, 3, 10, 10)) > 0.5).astype(jnp.float32)
    out3 = jax.block_until_ready(total_loss(lg3, tg3))
    ref3 = _reference(lg3, tg3)
    assert jnp.allclose(out3, ref3, atol=1e-5, rtol=1e-4), (out3, ref3)

    print("KERNEL_OK")
</pallas_src>

<mosaic_0001>
module attributes {stable_mosaic.version = 11 : i64} {
  func.func @kernel(%arg0: i32, %arg1: i32, %arg2: i32, %arg3: memref<1x8x128xf32, #tpu.memory_space<vmem>>, %arg4: memref<1x8x128xf32, #tpu.memory_space<vmem>>, %arg5: memref<1x1x4x128xf32, #tpu.memory_space<vmem>>, %arg6: memref<8x128xf32, #tpu.memory_space<vmem>>, %arg7: memref<8x128xf32, #tpu.memory_space<vmem>>, %arg8: memref<8x128xf32, #tpu.memory_space<vmem>>, %arg9: memref<8x128xf32, #tpu.memory_space<vmem>>) attributes {dimension_semantics = [#tpu.dimension_semantics<parallel>, #tpu.dimension_semantics<parallel>, #tpu.dimension_semantics<arbitrary>], iteration_bounds = array<i64: 1, 2, 1>, scalar_prefetch = 0 : i64, scratch_operands = 4 : i64, tpu.core_type = #tpu.core_type<tc>, window_params = [{transform_indices = @transform_0, window_bounds = array<i64: 1, 8, 128>}, {transform_indices = @transform_1, window_bounds = array<i64: 1, 8, 128>}, {transform_indices = @transform_2, window_bounds = array<i64: 1, 1, 4, 128>}]} {
    %c0_i32 = arith.constant 0 : i32
    %0 = arith.cmpi eq, %arg2, %c0_i32 : i32
    %1 = arith.extui %0 : i1 to i32
    %c0_i32_0 = arith.constant 0 : i32
    %2 = arith.cmpi ne, %1, %c0_i32_0 : i32
    scf.if %2 {
      %cst_28 = arith.constant 0.000000e+00 : f32
      %41 = vector.broadcast %cst_28 : f32 to vector<8x128xf32>
      %c0_29 = arith.constant 0 : index
      %c0_30 = arith.constant 0 : index
      %42 = vector.load %arg6[%c0_29, %c0_30] : memref<8x128xf32, #tpu.memory_space<vmem>>, vector<8x128xf32>
      tpu.vector_store %arg6[%c0_29, %c0_30], %41 {strides = array<i32>} : memref<8x128xf32, #tpu.memory_space<vmem>>, vector<8x128xf32>,
      %cst_31 = arith.constant 0.000000e+00 : f32
      %43 = vector.broadcast %cst_31 : f32 to vector<8x128xf32>
      %c0_32 = arith.constant 0 : index
      %c0_33 = arith.constant 0 : index
      %44 = vector.load %arg7[%c0_32, %c0_33] : memref<8x128xf32, #tpu.memory_space<vmem>>, vector<8x128xf32>
      tpu.vector_store %arg7[%c0_32, %c0_33], %43 {strides = array<i32>} : memref<8x128xf32, #tpu.memory_space<vmem>>, vector<8x128xf32>,
      %cst_34 = arith.constant 0.000000e+00 : f32
      %45 = vector.broadcast %cst_34 : f32 to vector<8x128xf32>
      %c0_35 = arith.constant 0 : index
      %c0_36 = arith.constant 0 : index
      %46 = vector.load %arg8[%c0_35, %c0_36] : memref<8x128xf32, #tpu.memory_space<vmem>>, vector<8x128xf32>
      tpu.vector_store %arg8[%c0_35, %c0_36], %45 {strides = array<i32>} : memref<8x128xf32, #tpu.memory_space<vmem>>, vector<8x128xf32>,
      %cst_37 = arith.constant 0.000000e+00 : f32
      %47 = vector.broadcast %cst_37 : f32 to vector<8x128xf32>
      %c0_38 = arith.constant 0 : index
      %c0_39 = arith.constant 0 : index
      %48 = vector.load %arg9[%c0_38, %c0_39] : memref<8x128xf32, #tpu.memory_space<vmem>>, vector<8x128xf32>
      tpu.vector_store %arg9[%c0_38, %c0_39], %47 {strides = array<i32>} : memref<8x128xf32, #tpu.memory_space<vmem>>, vector<8x128xf32>,
    } else {
    }
    %c0 = arith.constant 0 : index
    %c0_1 = arith.constant 0 : index
    %c0_2 = arith.constant 0 : index
    %3 = vector.load %arg3[%c0, %c0_1, %c0_2] : memref<1x8x128xf32, #tpu.memory_space<vmem>>, vector<1x8x128xf32>
    %4 = vector.shape_cast %3 : vector<1x8x128xf32> to vector<8x128xf32>
    %c0_3 = arith.constant 0 : index
    %c0_4 = arith.constant 0 : index
    %c0_5 = arith.constant 0 : index
    %5 = vector.load %arg4[%c0_3, %c0_4, %c0_5] : memref<1x8x128xf32, #tpu.memory_space<vmem>>, vector<1x8x128xf32>
    %6 = vector.shape_cast %5 : vector<1x8x128xf32> to vector<8x128xf32>
    %7 = math.absf %4 : vector<8x128xf32>
    %cst = arith.constant 0.000000e+00 : f32
    %8 = vector.broadcast %cst : f32 to vector<8x128xf32>
    %9 = arith.subf %8, %7 : vector<8x128xf32>
    %10 = math.exp %9 : vector<8x128xf32>
    %11 = math.log1p %10 : vector<8x128xf32>
    %cst_6 = arith.constant 0.000000e+00 : f32
    %12 = vector.broadcast %cst_6 : f32 to vector<8x128xf32>
    %13 = arith.maximumf %4, %12 : vector<8x128xf32>
    %14 = arith.mulf %4, %6 : vector<8x128xf32>
    %15 = arith.subf %13, %14 : vector<8x128xf32>
    %16 = arith.addf %15, %11 : vector<8x128xf32>
    %cst_7 = arith.constant 0.000000e+00 : f32
    %17 = vector.broadcast %cst_7 : f32 to vector<8x128xf32>
    %18 = arith.subf %17, %11 : vector<8x128xf32>
    %19 = math.exp %18 : vector<8x128xf32>
    %cst_8 = arith.constant 0.000000e+00 : f32
    %20 = vector.broadcast %cst_8 : f32 to vector<8x128xf32>
    %21 = arith.cmpf oge, %4, %20 : vector<8x128xf32>
    %cst_9 = arith.constant 1.000000e+00 : f32
    %22 = vector.broadcast %cst_9 : f32 to vector<8x128xf32>
    %23 = arith.subf %22, %19 : vector<8x128xf32>
    %24 = arith.select %21, %19, %23 : vector<8x128xi1>, vector<8x128xf32>
    %c0_10 = arith.constant 0 : index
    %c0_11 = arith.constant 0 : index
    %25 = vector.load %arg6[%c0_10, %c0_11] : memref<8x128xf32, #tpu.memory_space<vmem>>, vector<8x128xf32>
    %26 = arith.addf %25, %16 : vector<8x128xf32>
    %c0_12 = arith.constant 0 : index
    %c0_13 = arith.constant 0 : index
    %27 = vector.load %arg6[%c0_12, %c0_13] : memref<8x128xf32, #tpu.memory_space<vmem>>, vector<8x128xf32>
    tpu.vector_store %arg6[%c0_12, %c0_13], %26 {strides = array<i32>} : memref<8x128xf32, #tpu.memory_space<vmem>>, vector<8x128xf32>,
    %c0_14 = arith.constant 0 : index
    %c0_15 = arith.constant 0 : index
    %28 = vector.load %arg7[%c0_14, %c0_15] : memref<8x128xf32, #tpu.memory_space<vmem>>, vector<8x128xf32>
    %29 = arith.mulf %24, %6 : vector<8x128xf32>
    %30 = arith.addf %28, %29 : vector<8x128xf32>
    %c0_16 = arith.constant 0 : index
    %c0_17 = arith.constant 0 : index
    %31 = vector.load %arg7[%c0_16, %c0_17] : memref<8x128xf32, #tpu.memory_space<vmem>>, vector<8x128xf32>
    tpu.vector_store %arg7[%c0_16, %c0_17], %30 {strides = array<i32>} : memref<8x128xf32, #tpu.memory_space<vmem>>, vector<8x128xf32>,
    %c0_18 = arith.constant 0 : index
    %c0_19 = arith.constant 0 : index
    %32 = vector.load %arg8[%c0_18, %c0_19] : memref<8x128xf32, #tpu.memory_space<vmem>>, vector<8x128xf32>
    %33 = arith.addf %32, %24 : vector<8x128xf32>
    %c0_20 = arith.constant 0 : index
    %c0_21 = arith.constant 0 : index
    %34 = vector.load %arg8[%c0_20, %c0_21] : memref<8x128xf32, #tpu.memory_space<vmem>>, vector<8x128xf32>
    tpu.vector_store %arg8[%c0_20, %c0_21], %33 {strides = array<i32>} : memref<8x128xf32, #tpu.memory_space<vmem>>, vector<8x128xf32>,
    %c0_22 = arith.constant 0 : index
    %c0_23 = arith.constant 0 : index
    %35 = vector.load %arg9[%c0_22, %c0_23] : memref<8x128xf32, #tpu.memory_space<vmem>>, vector<8x128xf32>
    %36 = arith.addf %35, %6 : vector<8x128xf32>
    %c0_24 = arith.constant 0 : index
    %c0_25 = arith.constant 0 : index
    %37 = vector.load %arg9[%c0_24, %c0_25] : memref<8x128xf32, #tpu.memory_space<vmem>>, vector<8x128xf32>
    tpu.vector_store %arg9[%c0_24, %c0_25], %36 {strides = array<i32>} : memref<8x128xf32, #tpu.memory_space<vmem>>, vector<8x128xf32>,
    %c0_i32_26 = arith.constant 0 : i32
    %38 = arith.cmpi eq, %arg2, %c0_i32_26 : i32
    %39 = arith.extui %38 : i1 to i32
    %c0_i32_27 = arith.constant 0 : i32
    %40 = arith.cmpi ne, %39, %c0_i32_27 : i32
    scf.if %40 {
      %c0_28 = arith.constant 0 : index
      %c0_29 = arith.constant 0 : index
      %41 = vector.load %arg6[%c0_28, %c0_29] : memref<8x128xf32, #tpu.memory_space<vmem>>, vector<8x128xf32>
      %cst_30 = arith.constant dense<0.000000e+00> : vector<128xf32>
      %42 = vector.multi_reduction <add>, %41, %cst_30 [0] : vector<8x128xf32> to vector<128xf32>
      %c0_31 = arith.constant 0 : index
      %c0_32 = arith.constant 0 : index
      %c0_33 = arith.constant 0 : index
      %c0_34 = arith.constant 0 : index
      %43 = vector.load %arg5[%c0_31, %c0_32, %c0_33, %c0_34] : memref<1x1x4x128xf32, #tpu.memory_space<vmem>>, vector<1x1x1x128xf32>
      %44 = vector.shape_cast %43 : vector<1x1x1x128xf32> to vector<128xf32>
      %45 = vector.shape_cast %42 : vector<128xf32> to vector<1x1x1x128xf32>
      tpu.vector_store %arg5[%c0_31, %c0_32, %c0_33, %c0_34], %45 {strides = array<i32>} : memref<1x1x4x128xf32, #tpu.memory_space<vmem>>, vector<1x1x1x128xf32>,
      %c0_35 = arith.constant 0 : index
      %c0_36 = arith.constant 0 : index
      %46 = vector.load %arg7[%c0_35, %c0_36] : memref<8x128xf32, #tpu.memory_space<vmem>>, vector<8x128xf32>
      %cst_37 = arith.constant dense<0.000000e+00> : vector<128xf32>
      %47 = vector.multi_reduction <add>, %46, %cst_37 [0] : vector<8x128xf32> to vector<128xf32>
      %c0_38 = arith.constant 0 : index
      %c0_39 = arith.constant 0 : index
      %c1 = arith.constant 1 : index
      %c0_40 = arith.constant 0 : index
      %48 = vector.load %arg5[%c0_38, %c0_39, %c1, %c0_40] : memref<1x1x4x128xf32, #tpu.memory_space<vmem>>, vector<1x1x1x128xf32>
      %49 = vector.shape_cast %48 : vector<1x1x1x128xf32> to vector<128xf32>
      %50 = vector.shape_cast %47 : vector<128xf32> to vector<1x1x1x128xf32>
      tpu.vector_store %arg5[%c0_38, %c0_39, %c1, %c0_40], %50 {strides = array<i32>} : memref<1x1x4x128xf32, #tpu.memory_space<vmem>>, vector<1x1x1x128xf32>,
      %c0_41 = arith.constant 0 : index
      %c0_42 = arith.constant 0 : index
      %51 = vector.load %arg8[%c0_41, %c0_42] : memref<8x128xf32, #tpu.memory_space<vmem>>, vector<8x128xf32>
      %cst_43 = arith.constant dense<0.000000e+00> : vector<128xf32>
      %52 = vector.multi_reduction <add>, %51, %cst_43 [0] : vector<8x128xf32> to vector<128xf32>
      %c0_44 = arith.constant 0 : index
      %c0_45 = arith.constant 0 : index
      %c2 = arith.constant 2 : index
      %c0_46 = arith.constant 0 : index
      %53 = vector.load %arg5[%c0_44, %c0_45, %c2, %c0_46] : memref<1x1x4x128xf32, #tpu.memory_space<vmem>>, vector<1x1x1x128xf32>
      %54 = vector.shape_cast %53 : vector<1x1x1x128xf32> to vector<128xf32>
      %55 = vector.shape_cast %52 : vector<128xf32> to vector<1x1x1x128xf32>
      tpu.vector_store %arg5[%c0_44, %c0_45, %c2, %c0_46], %55 {strides = array<i32>} : memref<1x1x4x128xf32, #tpu.memory_space<vmem>>, vector<1x1x1x128xf32>,
      %c0_47 = arith.constant 0 : index
      %c0_48 = arith.constant 0 : index
      %56 = vector.load %arg9[%c0_47, %c0_48] : memref<8x128xf32, #tpu.memory_space<vmem>>, vector<8x128xf32>
      %cst_49 = arith.constant dense<0.000000e+00> : vector<128xf32>
      %57 = vector.multi_reduction <add>, %56, %cst_49 [0] : vector<8x128xf32> to vector<128xf32>
      %c0_50 = arith.constant 0 : index
      %c0_51 = arith.constant 0 : index
      %c3 = arith.constant 3 : index
      %c0_52 = arith.constant 0 : index
      %58 = vector.load %arg5[%c0_50, %c0_51, %c3, %c0_52] : memref<1x1x4x128xf32, #tpu.memory_space<vmem>>, vector<1x1x1x128xf32>
      %59 = vector.shape_cast %58 : vector<1x1x1x128xf32> to vector<128xf32>
      %60 = vector.shape_cast %57 : vector<128xf32> to vector<1x1x1x128xf32>
      tpu.vector_store %arg5[%c0_50, %c0_51, %c3, %c0_52], %60 {strides = array<i32>} : memref<1x1x4x128xf32, #tpu.memory_space<vmem>>, vector<1x1x1x128xf32>,
    } else {
    }
    return
  }
  func.func @transform_0(%arg0: i32, %arg1: i32, %arg2: i32) -> (i32, i32, i32) {
    %c1_i32 = arith.constant 1 : i32
    %0 = arith.muli %arg0, %c1_i32 : i32
    %1 = arith.addi %0, %arg2 : i32
    %c0_i32 = arith.constant 0 : i32
    %c0_i32_0 = arith.constant 0 : i32
    return %arg1, %1, %c0_i32 : i32, i32, i32
  }
  func.func @transform_1(%arg0: i32, %arg1: i32, %arg2: i32) -> (i32, i32, i32) {
    %c1_i32 = arith.constant 1 : i32
    %0 = arith.muli %arg0, %c1_i32 : i32
    %1 = arith.addi %0, %arg2 : i32
    %c0_i32 = arith.constant 0 : i32
    %c0_i32_0 = arith.constant 0 : i32
    return %arg1, %1, %c0_i32 : i32, i32, i32
  }
  func.func @transform_2(%arg0: i32, %arg1: i32, %arg2: i32) -> (i32, i32, i32, i32) {
    %c0_i32 = arith.constant 0 : i32
    %c0_i32_0 = arith.constant 0 : i32
    %c0_i32_1 = arith.constant 0 : i32
    return %arg0, %arg1, %c0_i32, %c0_i32_0 : i32, i32, i32, i32
  }
}

</mosaic_0001>

<llo_original>
// kernel: tpu_custom_call.1
$region0: #{tpu_custom_call.1}
  #allocation0 [shape = 'u32[]', space=smem, size = 0x4, offset = 0x4, fixed_abs, tag = 'smem constant byte address 0x4 - core index']
  #allocation1 [shape = 'u32[144,128]{1,0:T(1,128)}', space=vmem, size = 0x12000, scoped, tag = 'internal scratch']
  #allocation2 [shape = 'f32[8,128]{1,0:T(8,128)}', space=vmem, size = 0x1000, scoped, tag = 'scratch operand']
  #allocation3 [shape = 'f32[8,128]{1,0:T(8,128)}', space=vmem, size = 0x1000, scoped, tag = 'scratch operand']
  #allocation4 [shape = 'f32[8,128]{1,0:T(8,128)}', space=vmem, size = 0x1000, scoped, tag = 'scratch operand']
  #allocation5 [shape = 'f32[8,128]{1,0:T(8,128)}', space=vmem, size = 0x1000, scoped, tag = 'scratch operand']
  %s0 = inlined_call_operand.hbm [shape: f32[2,8,128], index: 0, kind: input, shape index: {}]
  %s1 = inlined_call_operand.hbm [shape: f32[2,8,128], index: 1, kind: input, shape index: {}]
  %s2 = inlined_call_operand.hbm [shape: f32[1,2,4,128], index: 2, kind: output, shape index: {}]
  %s3 = sld [smem:[#allocation0]]
  $region57: #{tpu_custom_call.1} parent=0
    _
  %s5 = ssub.s32 1, %s3
  %s6 = scalar_select 0, %s5, %s3
  $region1: #{tpu_custom_call.1} parent=0
    #allocation6 [shape = 'u8[8192]{0}', space=vmem, size = 0x2000, scoped, tag = 'input window, operand 0']
    #allocation7 [shape = 's32[2]{0}', space=sflag, size = 0x8, scoped, tag = 'scoped memory for tpu_custom_call.1']
    #allocation8 [shape = 's32[2]{0}', space=sflag, size = 0x8, scoped, tag = 'scoped memory for tpu_custom_call.1']
    #allocation9 [shape = 'u8[8192]{0}', space=vmem, size = 0x2000, scoped, tag = 'input window, operand 1']
    #allocation10 [shape = 's32[2]{0}', space=sflag, size = 0x8, scoped, tag = 'scoped memory for tpu_custom_call.1']
    #allocation11 [shape = 'u8[4096]{0}', space=vmem, size = 0x1000, scoped, tag = 'output window, operand 0']
    %7 = vsyncpa [#allocation7], 0
    %s8 = scalar_lea.sflag [#allocation7], 1
    %9 = vsyncpa %s8, 0
    %10 = vsyncpa [#allocation10], 0
    %s11 = scalar_lea.sflag [#allocation10], 1
    %12 = vsyncpa %s11, 0
    %13 = vsyncpa [#allocation8], 0
    %s14 = scalar_lea.sflag [#allocation8], 1
    %15 = vsyncpa %s14, 0
    loop: start=0, step=1, limit=4
    $region2: #{tpu_custom_call.1} parent=1 // loop_pre_header
      _
    $region3: #{tpu_custom_call.1} parent=1 // loop_header
      %s17 = sphi 0, %s21
      %p18 = scmp.ge.s32.totalorder %s17, 4
      %s24 = sphi 0, %s43
      %s25 = sphi 0, %s39
      %s26 = sphi 0, %s35
      %s27 = sphi 0, %s24
      %s28 = sphi 0, %s25
      %s29 = sphi 0, %s26
      %s30 = sphi 0, %s27
      %s31 = sphi 0, %s28
      %s32 = sphi 0, %s29
      %s50 = sphi 0, %s52
      %s53 = sphi 0, %s50
      %s54 = sphi 0, %s53
      %s70 = sphi 0, %s54
      %s80 = sphi 0, %s82
      %s83 = sphi 0, %s80
      %s84 = sphi 0, %s83
      %s100 = sphi 0, %s84
      %s108 = sphi 0, %s110
      %s111 = sphi 0, %s108
      %s112 = sphi 0, %s111
      %s128 = sphi 0, %s112
    $region4: #{tpu_custom_call.1} parent=1 // loop_header_branch
      %20 = sbr.rel (%p18) target = $region8
    $region5: #{tpu_custom_call.1} parent=1 // loop_body
      %s22 = ssub.s32 %s17, 1
      %s23 = ssub.s32 %s17, 2
      %s33 = sadd.s32 1, %s26
      %p34 = scmp.ge.s32.totalorder %s33, 1
      %s35 = scalar_select %p34, 0, %s33
      %s36 = sadd.s32 1, %s25
      %s37 = scalar_select %p34, %s36, %s25
      %p38 = scmp.ge.s32.totalorder %s37, 2
      %s39 = scalar_select %p38, 0, %s37
      %s40 = sadd.s32 1, %s24
      %s41 = scalar_select %p38, %s40, %s24
      %p42 = scmp.ge.s32.totalorder %s41, 1
      %s43 = scalar_select %p42, 0, %s41
      %s44 = sadd.s32 %s24, %s26
      %s45 = sadd.s32 %s43, %s35
      %s46 = ssub.s32 %s25, %s39
      %s47 = ssub.s32 %s44, %s45
      %s48 = sor.u32 %s46, %s47
      %p49 = scmp.eq.s32.totalorder %s48, 0
      %s51 = sadd.s32 %s50, 1
      %s52 = scalar_select %p49, %s50, %s51
      %p55 = pneg %p49
      %p56 = scmp.eq.s32.totalorder %s17, 1
      %p57 = por %p55, %p56
      %p58 = scmp.ne.s32.totalorder %s50, %s53
      %p59 = scmp.eq.s32.totalorder %s17, 0
      %p60 = por %p58, %p59
      %p61 = scmp.ne.s32.totalorder %s50, %s53
      %p62 = scmp.eq.s32.totalorder %s22, 1
      %p63 = por %p61, %p62
      %p64 = scmp.ne.s32.totalorder %s53, %s54
      %p65 = scmp.eq.s32.totalorder %s22, 0
      %p66 = por %p64, %p65
      %p67 = scmp.ne.s32.totalorder %s53, %s54
      %p68 = scmp.eq.s32.totalorder %s23, 1
      %p69 = por %p67, %p68
      %p71 = scmp.ne.s32.totalorder %s54, %s70
      %p72 = scmp.eq.s32.totalorder %s23, 0
      %p73 = por %p71, %p72
      %s74 = sadd.s32 %s24, %s26
      %s75 = sadd.s32 %s43, %s35
      %s76 = ssub.s32 %s25, %s39
      %s77 = ssub.s32 %s74, %s75
      %s78 = sor.u32 %s76, %s77
      %p79 = scmp.eq.s32.totalorder %s78, 0
      %s81 = sadd.s32 %s80, 1
      %s82 = scalar_select %p79, %s80, %s81
      %p85 = pneg %p79
      %p86 = scmp.eq.s32.totalorder %s17, 1
      %p87 = por %p85, %p86
      %p88 = scmp.ne.s32.totalorder %s80, %s83
      %p89 = scmp.eq.s32.totalorder %s17, 0
      %p90 = por %p88, %p89
      %p91 = scmp.ne.s32.totalorder %s80, %s83
      %p92 = scmp.eq.s32.totalorder %s22, 1
      %p93 = por %p91, %p92
      %p94 = scmp.ne.s32.totalorder %s83, %s84
      %p95 = scmp.eq.s32.totalorder %s22, 0
      %p96 = por %p94, %p95
      %p97 = scmp.ne.s32.totalorder %s83, %s84
      %p98 = scmp.eq.s32.totalorder %s23, 1
      %p99 = por %p97, %p98
      %p101 = scmp.ne.s32.totalorder %s84, %s100
      %p102 = scmp.eq.s32.totalorder %s23, 0
      %p103 = por %p101, %p102
      %s104 = ssub.s32 %s24, %s43
      %s105 = ssub.s32 %s25, %s39
      %s106 = sor.u32 %s104, %s105
      %p107 = scmp.eq.s32.totalorder %s106, 0
      %s109 = sadd.s32 %s108, 1
      %s110 = scalar_select %p107, %s108, %s109
      %p113 = pneg %p107
      %p114 = scmp.eq.s32.totalorder %s17, 1
      %p115 = por %p113, %p114
      %p116 = scmp.ne.s32.totalorder %s108, %s111
      %p117 = scmp.eq.s32.totalorder %s17, 0
      %p118 = por %p116, %p117
      %p119 = scmp.ne.s32.totalorder %s108, %s111
      %p120 = scmp.eq.s32.totalorder %s22, 1
      %p121 = por %p119, %p120
      %p122 = scmp.ne.s32.totalorder %s111, %s112
      %p123 = scmp.eq.s32.totalorder %s22, 0
      %p124 = por %p122, %p123
      %p125 = scmp.ne.s32.totalorder %s111, %s112
      %p126 = scmp.eq.s32.totalorder %s23, 1
      %p127 = por %p125, %p126
      %p129 = scmp.ne.s32.totalorder %s112, %s128
      %p130 = scmp.eq.s32.totalorder %s23, 0
      %p131 = por %p129, %p130
      %p132 = scmp.le.s32.totalorder 1, %s17
      %p133 = scmp.lt.s32.totalorder %s17, 3
      %p134 = pnand %p132, %p133
      %p135 = pneg %p134
      // Predicated region
      $region9: #{tpu_custom_call.1} parent=5 // pred_check
        _
      $region10: #{tpu_custom_call.1} parent=5 // pred_check_branch
        %137 = sbr.rel (%p134) target = $region12
      $region11: #{tpu_custom_call.1} parent=5 // pred_region
        %s138 = ssub.s32 %s17, 1
      $region12: #{tpu_custom_call.1} parent=5 // pred_fallthru
        _
      %p139 = scmp.lt.s32.totalorder %s17, 2
      // Predicated region
      $region13: #{tpu_custom_call.1} parent=5 // pred_check
        %p140 = pneg %p139
      $region14: #{tpu_custom_call.1} parent=5 // pred_check_branch
        %142 = sbr.rel (%p140) target = $region16
      $region15: #{tpu_custom_call.1} parent=5 // pred_region
        // Predicated region
        $region17: #{tpu_custom_call.1} parent=15 // pred_check
          %p143 = pneg %p60
        $region18: #{tpu_custom_call.1} parent=15 // pred_check_branch
          %145 = sbr.rel (%p143) target = $region20
        $region19: #{tpu_custom_call.1} parent=15 // pred_region
          %s146 = sand.u32 %s50, 1
          %s147 = scalar_lea.sflag [#allocation7], %s146
          %s148 = sand.u32 %s50, 1
          %s149 = smul.addr %s148, 8
          %s150 = scalar_lea.vmem [#allocation6], %s149
          %s151 = sadd.s32 %s24, %s26
          %s153 = ssub.s32 128, 128
          %154 = vsyncadd %s147, %s153
          %s155 = sadd.s32 %s151, %s25
          %s156 = smul.addr %s155, 128
          %s157 = scalar_lea.hbm %s0, %s156
          %s159 = sshll.u32 %s150, 4
          %s160 = int_to_ptr.vmem [resolvable:$true] %s159
          %162 = dma.hbm_to_vmem [thread:$0]  %s157, 128, %s160, %s147
        $region20: #{tpu_custom_call.1} parent=15 // pred_fallthru
          _
        // Predicated region
        $region21: #{tpu_custom_call.1} parent=15 // pred_check
          %p163 = pneg %p90
        $region22: #{tpu_custom_call.1} parent=15 // pred_check_branch
          %165 = sbr.rel (%p163) target = $region24
        $region23: #{tpu_custom_call.1} parent=15 // pred_region
          %s166 = sand.u32 %s80, 1
          %s167 = scalar_lea.sflag [#allocation10], %s166
          %s168 = sand.u32 %s80, 1
          %s169 = smul.addr %s168, 8
          %s170 = scalar_lea.vmem [#allocation9], %s169
          %s171 = sadd.s32 %s24, %s26
          %s173 = ssub.s32 128, 128
          %174 = vsyncadd %s167, %s173
          %s175 = sadd.s32 %s171, %s25
          %s176 = smul.addr %s175, 128
          %s177 = scalar_lea.hbm %s1, %s176
          %s179 = sshll.u32 %s170, 4
          %s180 = int_to_ptr.vmem [resolvable:$true] %s179
          %182 = dma.hbm_to_vmem [thread:$0]  %s177, 128, %s180, %s167
        $region24: #{tpu_custom_call.1} parent=15 // pred_fallthru
          _
      $region16: #{tpu_custom_call.1} parent=5 // pred_fallthru
        _
      %p183 = scmp.le.s32.totalorder 1, %s17
      %p184 = scmp.lt.s32.totalorder %s17, 3
      %p185 = pnand %p183, %p184
      %p186 = pneg %p185
      // Predicated region
      $region25: #{tpu_custom_call.1} parent=5 // pred_check
        _
      $region26: #{tpu_custom_call.1} parent=5 // pred_check_branch
        %188 = sbr.rel (%p185) target = $region28
      $region27: #{tpu_custom_call.1} parent=5 // pred_region
        %s189 = ssub.s32 %s17, 1
        %s190 = sand.u32 %s53, 1
        %s191 = scalar_lea.sflag [#allocation7], %s190
        %s192 = sand.u32 %s53, 1
        %s193 = smul.addr %s192, 8
        %s194 = scalar_lea.vmem [#allocation6], %s193
        // Predicated region
        $region29: #{tpu_custom_call.1} parent=27 // pred_check
          %p195 = pneg %p66
        $region30: #{tpu_custom_call.1} parent=27 // pred_check_branch
          %197 = sbr.rel (%p195) target = $region32
        $region31: #{tpu_custom_call.1} parent=27 // pred_region
          %198 = dma.done %s191, 128
        $region32: #{tpu_custom_call.1} parent=27 // pred_fallthru
          _
        %s199 = sand.u32 %s83, 1
        %s200 = scalar_lea.sflag [#allocation10], %s199
        %s201 = sand.u32 %s83, 1
        %s202 = smul.addr %s201, 8
        %s203 = scalar_lea.vmem [#allocation9], %s202
        // Predicated region
        $region33: #{tpu_custom_call.1} parent=27 // pred_check
          %p204 = pneg %p96
        $region34: #{tpu_custom_call.1} parent=27 // pred_check_branch
          %206 = sbr.rel (%p204) target = $region36
        $region35: #{tpu_custom_call.1} parent=27 // pred_region
          %207 = dma.done %s200, 128
        $region36: #{tpu_custom_call.1} parent=27 // pred_fallthru
          _
        %s208 = sand.u32 %s53, 1
        %s209 = scalar_lea.sflag [#allocation7], %s208
        %s210 = sand.u32 %s53, 1
        %s211 = smul.addr %s210, 8
        %s212 = scalar_lea.vmem [#allocation6], %s211
        %p213 = pneg %p66
        %p214 = pneg %p63
        %s215 = sand.u32 %s83, 1
        %s216 = scalar_lea.sflag [#allocation10], %s215
        %s217 = sand.u32 %s83, 1
        %s218 = smul.addr %s217, 8
        %s219 = scalar_lea.vmem [#allocation9], %s218
        %p220 = pneg %p96
        %p221 = pneg %p93
        %p222 = pneg %p124
        %p223 = pneg %p121
        %s224 = sand.u32 %s111, 1
        %s225 = scalar_lea.sflag [#allocation8], %s224
        %s226 = sand.u32 %s111, 1
        %s227 = smul.addr %s226, 4
        %s228 = scalar_lea.vmem [#allocation11], %s227
        %s229 = sadd.s32 %s27, %s29
        %s230 = sadd.s32 %s27, %s29
        %p231 = scmp.eq.s32.totalorder %s29, 0
        // Predicated region
        $region37: #{tpu_custom_call.1} parent=27 // pred_check
          %p232 = pneg %p231
        $region38: #{tpu_custom_call.1} parent=27 // pred_check_branch
          %234 = sbr.rel (%p232) target = $region40
        $region39: #{tpu_custom_call.1} parent=27 // pred_region
          %235 = vst [vmem:[#allocation2] sm:$0xff] 0.0
          %236 = vst [vmem:[#allocation3] sm:$0xff] 0.0
          %237 = vst [vmem:[#allocation4] sm:$0xff] 0.0
          %238 = vst [vmem:[#allocation5] sm:$0xff] 0.0
        $region40: #{tpu_custom_call.1} parent=27 // pred_fallthru
          _
        %v239 = vld [vmem:[%s194] sm:$0xff]
        %v240 = vld [vmem:[%s203] sm:$0xff]
        %v241 = vand.u32 2147483647, %v239
        %v242 = vsub.f32 0.0, %v241
        %v243 = vmul.f32 %v242, 1.442695
        %v244 = vpow.pop %v243
        %v245 = vadd.f32 %v244, 1.0
        %v246 = vlog2.pop %v245
        %v247 = vmul.f32 %v246, 0.6931472
        %v248 = vmul.f32 -0.5, %v244
        %v249 = vadd.f32 %v248, 1.0
        %v250 = vmul.f32 %v249, %v244
        %v251 = vand.u32 2147483647, %v244
        %vm252 = vcmp.lt.f32.partialorder %v251, 0.0004427343
        %v253 = vsel %vm252, %v250, %v247
        %v254 = vmax.f32 %v239, 0.0
        %v255 = vmul.f32 %v239, %v240
        %v256 = vsub.f32 %v254, %v255
        %v257 = vadd.f32 %v256, %v253
        %v258 = vsub.f32 0.0, %v253
        %v259 = vmul.f32 %v258, 1.442695
        %v260 = vpow.pop %v259
        %vm261 = vcmp.ge.f32.partialorder %v239, 0.0
        %v262 = vsub.f32 1.0, %v260
        %v263 = vsel %vm261, %v260, %v262
        %v264 = vld [vmem:[#allocation2] sm:$0xff]
        %v265 = vadd.f32 %v264, %v257
        %266 = vst [vmem:[#allocation2] sm:$0xff] %v265
        %v267 = vld [vmem:[#allocation3] sm:$0xff]
        %v268 = vmul.f32 %v263, %v240
        %v269 = vadd.f32 %v267, %v268
        %270 = vst [vmem:[#allocation3] sm:$0xff] %v269
        %v271 = vld [vmem:[#allocation4] sm:$0xff]
        %v272 = vadd.f32 %v271, %v263
        %273 = vst [vmem:[#allocation4] sm:$0xff] %v272
        %v274 = vld [vmem:[#allocation5] sm:$0xff]
        %v275 = vadd.f32 %v274, %v240
        %276 = vst [vmem:[#allocation5] sm:$0xff] %v275
        // Predicated region
        $region41: #{tpu_custom_call.1} parent=27 // pred_check
          %p277 = pneg %p231
        $region42: #{tpu_custom_call.1} parent=27 // pred_check_branch
          %279 = sbr.rel (%p277) target = $region44
        $region43: #{tpu_custom_call.1} parent=27 // pred_region
          %v280 = vld [vmem:[#allocation2] sm:$0xff]
          %v281 = vrot.slane %v280, 4
          %v282 = vadd.f32 %v280, %v281
          %v283 = vrot.slane %v282, 2
          %v284 = vadd.f32 %v282, %v283
          %v285 = vrot.slane %v284, 1
          %v286 = vadd.f32 %v284, %v285
          %287 = vst [vmem:[%s228] sm:$0x1] %v286
          %v288 = vld [vmem:[#allocation3] sm:$0xff]
          %v289 = vrot.slane %v288, 4
          %v290 = vadd.f32 %v288, %v289
          %v291 = vrot.slane %v290, 2
          %v292 = vadd.f32 %v290, %v291
          %v293 = vrot.slane %v292, 1
          %v294 = vadd.f32 %v292, %v293
          %295 = vst [vmem:[%s228 + $0x1] sm:$0x1] %v294
          %v296 = vld [vmem:[#allocation4] sm:$0xff]
          %v297 = vrot.slane %v296, 4
          %v298 = vadd.f32 %v296, %v297
          %v299 = vrot.slane %v298, 2
          %v300 = vadd.f32 %v298, %v299
          %v301 = vrot.slane %v300, 1
          %v302 = vadd.f32 %v300, %v301
          %303 = vst [vmem:[%s228 + $0x2] sm:$0x1] %v302
          %v304 = vld [vmem:[#allocation5] sm:$0xff]
          %v305 = vrot.slane %v304, 4
          %v306 = vadd.f32 %v304, %v305
          %v307 = vrot.slane %v306, 2
          %v308 = vadd.f32 %v306, %v307
          %v309 = vrot.slane %v308, 1
          %v310 = vadd.f32 %v308, %v309
          %311 = vst [vmem:[%s228 + $0x3] sm:$0x1] %v310
        $region44: #{tpu_custom_call.1} parent=27 // pred_fallthru
          _
        %s312 = sand.u32 %s111, 1
        %s313 = scalar_lea.sflag [#allocation8], %s312
        %s314 = sand.u32 %s111, 1
        %s315 = smul.addr %s314, 4
        %s316 = scalar_lea.vmem [#allocation11], %s315
        // Predicated region
        $region45: #{tpu_custom_call.1} parent=27 // pred_check
          %p317 = pneg %p121
        $region46: #{tpu_custom_call.1} parent=27 // pred_check_branch
          %319 = sbr.rel (%p317) target = $region48
        $region47: #{tpu_custom_call.1} parent=27 // pred_region
          %s321 = ssub.s32 64, 64
          %322 = vsyncadd %s313, %s321
          %s323 = smul.addr %s27, 2
          %s324 = sadd.s32 %s28, %s323
          %s325 = smul.addr %s324, 64
          %s326 = scalar_lea.hbm %s2, %s325
          %s328 = sshll.u32 %s316, 4
          %s329 = int_to_ptr.vmem [resolvable:$true] %s328
          %331 = dma.vmem_to_hbm [thread:$0]  %s329, 64, %s326, %s313
        $region48: #{tpu_custom_call.1} parent=27 // pred_fallthru
          _
      $region28: #{tpu_custom_call.1} parent=5 // pred_fallthru
        _
      %p332 = scmp.le.s32.totalorder 2, %s17
      // Predicated region
      $region49: #{tpu_custom_call.1} parent=5 // pred_check
        %p333 = pneg %p332
      $region50: #{tpu_custom_call.1} parent=5 // pred_check_branch
        %335 = sbr.rel (%p333) target = $region52
      $region51: #{tpu_custom_call.1} parent=5 // pred_region
        %s336 = ssub.s32 %s17, 2
        // Predicated region
        $region53: #{tpu_custom_call.1} parent=51 // pred_check
          %p337 = pneg %p127
        $region54: #{tpu_custom_call.1} parent=51 // pred_check_branch
          %339 = sbr.rel (%p337) target = $region56
        $region55: #{tpu_custom_call.1} parent=51 // pred_region
          %s340 = sand.u32 %s112, 1
          %s341 = scalar_lea.sflag [#allocation8], %s340
          %s342 = sand.u32 %s112, 1
          %s343 = smul.addr %s342, 4
          %s344 = scalar_lea.vmem [#allocation11], %s343
          %345 = dma.done %s341, 64
        $region56: #{tpu_custom_call.1} parent=51 // pred_fallthru
          _
      $region52: #{tpu_custom_call.1} parent=5 // pred_fallthru
        _
    $region6: #{tpu_custom_call.1} parent=1 // loop_footer
      %s21 = sadd.s32 1, %s17
    $region7: #{tpu_custom_call.1} parent=1 // loop_footer_branch
      %16 = sbr.rel target = $region3
    $region8: #{tpu_custom_call.1} parent=1 // loop_exit
      _
    %346 = vsyncpa [#allocation7], 1
    %s347 = scalar_lea.sflag [#allocation7], 1
    %348 = vsyncpa %s347, 1
    %349 = vsyncpa [#allocation10], 1
    %s350 = scalar_lea.sflag [#allocation10], 1
    %351 = vsyncpa %s350, 1
    %352 = vsyncpa [#allocation8], 1
    %s353 = scalar_lea.sflag [#allocation8], 1
    %354 = vsyncpa %s353, 1

</llo_original>
